<compile_context>
chip_gen: v7x
topology: tpu7x:2x2x1
jax: 0.10.0
libtpu: 0.0.40
codegen_flags: <defaults>
</compile_context>

<pallas_src>
from functools import partial

import jax
import jax.numpy as jnp
from jax.experimental import pallas as pl
from jax.experimental.pallas import tpu as pltpu


# ----------------------------------------------------------------------------
# Fused kernel: backbone head + avg-pool + hidden layers + all task heads
# ----------------------------------------------------------------------------
def fused_forward_kernel(x_ref, bbw_ref, bbb_ref, wh_ref, bh_ref, wo_ref,
                         bo_ref, out_ref):
    """One batch-block of the ContinualClassifier forward.

    x_ref   : (NI, BB, HW, C) bf16  channels-last pixels, ni-major inside block
    bbw_ref : (C, E)          bf16  1x1-conv weight of the SqueezeNet head
    bbb_ref : (1, E)          f32   its bias
    wh_ref  : (NI*E, K*H)     bf16  all knowledge-bin hidden Linear weights
    bh_ref  : (1, K*H)        f32   their biases (sorted-bin concat order)
    wo_ref  : (K*H, T*Ncls)   bf16  all task-head Linear weights (sorted tasks)
    bo_ref  : (1, T*Ncls)     f32   their biases
    out_ref : (BB, T*Ncls)    f32   lane-dense logits slab for this batch block
    """
    NI, BB, HW, C = x_ref.shape
    E = bbw_ref.shape[1]
    _, KH = wh_ref.shape
    inv_hw = 1.0 / HW

    # Backbone classifier head (eval): Dropout = identity -> 1x1 conv -> ReLU,
    # batched over every pixel of the block in one bf16 MXU matmul, f32 accum.
    x = x_ref[...].reshape(NI * BB * HW, C)
    y = jnp.dot(x, bbw_ref[...], preferred_element_type=jnp.float32)
    y = jnp.maximum(y + bbb_ref[...], 0.0)                        # (NI*BB*HW, E) f32

    # AdaptiveAvgPool2d((1,1)) + flatten: sublane reduce over the HW rows of
    # each image (replaces the old explicit pooling matmul / pool matrix DMA).
    pooled = y.reshape(NI * BB, HW, E).sum(axis=1) * inv_hw       # (NI*BB, E) f32

    # Hidden layers of all K knowledge bins fused into one (NI*E, K*H) weight.
    # `pooled` rows are ni-major inside the block, so every ni-chunk of the
    # fused contraction is a contiguous (BB, E) slice (no sublane->lane reshape).
    acc = jnp.zeros((BB, KH), jnp.float32)
    for ni in range(NI):  # static & tiny: NI == number of tasks
        acc = acc + jnp.dot(
            pooled[ni * BB:(ni + 1) * BB, :].astype(wh_ref.dtype),
            wh_ref[ni * E:(ni + 1) * E, :],
            preferred_element_type=jnp.float32)
    hid = jnp.maximum(acc + bh_ref[...], 0.0)                     # (BB, K*H) f32

    # All task classification heads fused into one (K*H, T*Ncls) weight;
    # single lane-dense store of the logits slab for this batch block.
    out_ref[...] = (jnp.dot(hid.astype(wo_ref.dtype), wo_ref[...],
                            preferred_element_type=jnp.float32) + bo_ref[...])


# ----------------------------------------------------------------------------
# One-time parameter layout plumbing (hoisted out of the per-call path)
# ----------------------------------------------------------------------------
def prepare_params(params):
    """Fuse per-bin / per-head weights into single matmul operands and cast the
    streamed matrices to bf16 (biases stay f32). Call once at model load."""
    E = params["bb_w"].shape[1]
    K, F, H = params["wh"].shape
    T, _, _, Ncls = params["wo"].shape
    return {
        "bb_w": params["bb_w"].astype(jnp.bfloat16),                              # (C, E)
        "bb_b": params["bb_b"].reshape(1, E).astype(jnp.float32),                 # (1, E)
        "wh": jnp.transpose(params["wh"], (1, 0, 2))
                 .reshape(F, K * H).astype(jnp.bfloat16),                         # (F, K*H)
        "bh": params["bh"].reshape(1, K * H).astype(jnp.float32),                 # (1, K*H)
        "wo": jnp.transpose(params["wo"], (1, 2, 0, 3))
                 .reshape(K * H, T * Ncls).astype(jnp.bfloat16),                  # (K*H, T*Ncls)
        "bo": params["bo"].reshape(1, T * Ncls).astype(jnp.float32),              # (1, T*Ncls)
    }


# ----------------------------------------------------------------------------
# Jitted forward wrapper
# ----------------------------------------------------------------------------
@partial(jax.jit, static_argnames=("n_classes",))
def continual_classifier_forward(imgs, prep, *, n_classes):
    B, NI, C, Hh, Ww = imgs.shape
    HW = Hh * Ww
    E = prep["bb_w"].shape[1]
    F, KH = prep["wh"].shape
    TN = prep["wo"].shape[1]
    T = TN // n_classes
    assert F == NI * E
    # HW must be a multiple of 8 for the relayout-free in-kernel pool reduce.
    # TODO(synk): for real SqueezeNet feature maps (HW=169) pad to 176 with a
    # validity mask folded into the 1/HW scale.
    assert HW % 8 == 0

    # NCHW -> channels-last pixel slab, ni-major inside each batch block so
    # every image's pooled embedding is a contiguous row slice in the kernel.
    x4 = jnp.transpose(imgs, (1, 0, 3, 4, 2)).reshape(NI, B, HW, C)
    x4 = x4.astype(jnp.bfloat16)

    # Batch grid: "parallel" so megacore / both v7x TensorCores can split it.
    # block_b must be a multiple of 8 or the full batch (out-block sublane rule).
    block_b = 8 if (B % 8 == 0) else B
    grid = (B // block_b,)

    flops = 2 * (NI * B * HW * C * E + B * F * KH + B * KH * TN)
    bytes_accessed = (x4.size * 2 + prep["bb_w"].size * 2 + prep["wh"].size * 2
                      + prep["wo"].size * 2 + (E + KH + TN) * 4 + B * TN * 4)

    out = pl.pallas_call(
        fused_forward_kernel,
        out_shape=jax.ShapeDtypeStruct((B, TN), jnp.float32),
        grid=grid,
        in_specs=[
            pl.BlockSpec((NI, block_b, HW, C), lambda i: (0, i, 0, 0)),  # x
            pl.BlockSpec((C, E), lambda i: (0, 0)),                      # bb_w (resident)
            pl.BlockSpec((1, E), lambda i: (0, 0)),                      # bb_b
            pl.BlockSpec((F, KH), lambda i: (0, 0)),                     # wh
            pl.BlockSpec((1, KH), lambda i: (0, 0)),                     # bh
            pl.BlockSpec((KH, TN), lambda i: (0, 0)),                    # wo
            pl.BlockSpec((1, TN), lambda i: (0, 0)),                     # bo
        ],
        out_specs=pl.BlockSpec((block_b, TN), lambda i: (i, 0)),
        compiler_params=pltpu.CompilerParams(
            dimension_semantics=("parallel",)),
        cost_estimate=pl.CostEstimate(flops=flops, transcendentals=0,
                                      bytes_accessed=bytes_accessed),
    )(x4, prep["bb_w"], prep["bb_b"], prep["wh"], prep["bh"],
      prep["wo"], prep["bo"])

    # stack([head_t(hidden) for t in sorted(heads)], dim=-1) -> (B, Ncls, T); .squeeze()
    logits = jnp.transpose(out.reshape(B, T, n_classes), (0, 2, 1))
    return jnp.squeeze(logits)


# ----------------------------------------------------------------------------
# Pure-JAX f32 reference for correctness checking
# ----------------------------------------------------------------------------
def reference_forward(imgs, params):
    B, NI, C, Hh, Ww = imgs.shape
    x = imgs.reshape(B * NI, C, Hh, Ww)
    x = jnp.transpose(x, (0, 2, 3, 1)).reshape(B * NI, Hh * Ww, C)
    y = jnp.maximum(jnp.einsum("nlc,ce->nle", x, params["bb_w"]) + params["bb_b"], 0.0)
    embs = y.mean(axis=1)
    bb = embs.reshape(B, -1)
    K = params["wh"].shape[0]
    hid = jnp.concatenate(
        [jnp.maximum(bb @ params["wh"][k] + params["bh"][k], 0.0) for k in range(K)],
        axis=-1)
    T = params["wo"].shape[0]
    Ncls = params["wo"].shape[-1]
    logits = jnp.stack(
        [hid @ params["wo"][t].reshape(-1, Ncls) + params["bo"][t] for t in range(T)],
        axis=-1)
    return jnp.squeeze(logits)


if __name__ == "__main__":
    # Config (small, consistent with the module):
    #   classes        = {'task0': 5, 'task1': 5}              -> T = num_inputs = 2
    #   knowledge_bins = ['binA', 'binB'] (modular, no 'none') -> K = 2
    #   emb_size = 32, hidden_size = 32, head input = K*hidden = 64
    B, NI, C, Himg, Wimg = 2, 2, 4, 8, 8
    E, Hhid, K, T, Ncls = 32, 32, 2, 2, 5
    F = NI * E

    key = jax.random.PRNGKey(0)
    k_img, k_bbw, k_wh, k_bh, k_wo, k_bo = jax.random.split(key, 6)

    imgs = jax.random.normal(k_img, (B, NI, C, Himg, Wimg), jnp.float32)

    params = {
        # final_conv init: normal(mean=0, std=0.01); bias zeroed (deterministic stand-in)
        "bb_w": 0.01 * jax.random.normal(k_bbw, (C, E), jnp.float32),
        "bb_b": jnp.zeros((E,), jnp.float32),
        # hidden layers, stacked in sorted knowledge-bin order
        "wh": 0.1 * jax.random.normal(k_wh, (K, F, Hhid), jnp.float32),
        "bh": 0.1 * jax.random.normal(k_bh, (K, Hhid), jnp.float32),
        # heads, stacked in sorted task order; weight reshaped [K*Hhid, Ncls] -> [K, Hhid, Ncls]
        "wo": 0.1 * jax.random.normal(k_wo, (T, K, Hhid, Ncls), jnp.float32),
        "bo": 0.1 * jax.random.normal(k_bo, (T, Ncls), jnp.float32),
    }

    prep = prepare_params(params)                       # one-time layout plumbing
    out = continual_classifier_forward(imgs, prep, n_classes=Ncls)
    out = jax.block_until_ready(out)

    ref = reference_forward(imgs, params)               # pure f32 reference
    assert out.shape == ref.shape == (B, Ncls, T), (out.shape, ref.shape)
    # bf16 MXU operands vs f32 reference -> loosened (but still tight) tolerance.
    assert jnp.allclose(out, ref, atol=2e-2, rtol=2e-2), "mismatch vs reference"

    print("KERNEL_OK")
</pallas_src>

<mosaic_0001>
module attributes {stable_mosaic.version = 11 : i64} {
  func.func @fused_forward_kernel(%arg0: i32, %arg1: memref<2x2x64x4xbf16, #tpu.memory_space<vmem>>, %arg2: memref<4x32xbf16, #tpu.memory_space<vmem>>, %arg3: memref<1x32xf32, #tpu.memory_space<vmem>>, %arg4: memref<64x64xbf16, #tpu.memory_space<vmem>>, %arg5: memref<1x64xf32, #tpu.memory_space<vmem>>, %arg6: memref<64x10xbf16, #tpu.memory_space<vmem>>, %arg7: memref<1x10xf32, #tpu.memory_space<vmem>>, %arg8: memref<2x10xf32, #tpu.memory_space<vmem>>) attributes {dimension_semantics = [#tpu.dimension_semantics<parallel>], iteration_bounds = array<i64: 1>, scalar_prefetch = 0 : i64, scratch_operands = 0 : i64, tpu.core_type = #tpu.core_type<tc>, window_params = [{transform_indices = @transform_0, window_bounds = array<i64: 2, 2, 64, 4>}, {pipeline_mode = #tpu.pipeline_mode<synchronous>, transform_indices = @transform_1, window_bounds = array<i64: 4, 32>}, {pipeline_mode = #tpu.pipeline_mode<synchronous>, transform_indices = @transform_2, window_bounds = array<i64: 1, 32>}, {pipeline_mode = #tpu.pipeline_mode<synchronous>, transform_indices = @transform_3, window_bounds = array<i64: 64, 64>}, {pipeline_mode = #tpu.pipeline_mode<synchronous>, transform_indices = @transform_4, window_bounds = array<i64: 1, 64>}, {pipeline_mode = #tpu.pipeline_mode<synchronous>, transform_indices = @transform_5, window_bounds = array<i64: 64, 10>}, {pipeline_mode = #tpu.pipeline_mode<synchronous>, transform_indices = @transform_6, window_bounds = array<i64: 1, 10>}, {transform_indices = @transform_7, window_bounds = array<i64: 2, 10>}]} {
    %c0 = arith.constant 0 : index
    %c0_0 = arith.constant 0 : index
    %c0_1 = arith.constant 0 : index
    %c0_2 = arith.constant 0 : index
    %0 = vector.load %arg1[%c0, %c0_0, %c0_1, %c0_2] : memref<2x2x64x4xbf16, #tpu.memory_space<vmem>>, vector<2x2x64x4xbf16>
    %1 = vector.shape_cast %0 : vector<2x2x64x4xbf16> to vector<256x4xbf16>
    %c0_3 = arith.constant 0 : index
    %c0_4 = arith.constant 0 : index
    %2 = vector.load %arg2[%c0_3, %c0_4] : memref<4x32xbf16, #tpu.memory_space<vmem>>, vector<4x32xbf16>
    %cst = arith.constant dense<0.000000e+00> : vector<256x32xf32>
    %3 = tpu.matmul %1, %2, %cst {dimension_numbers = #tpu.dot_dimension_numbers<[1], [0], [0], [1], [0, 0, 1, 1], [], []>} : vector<256x4xbf16>, vector<4x32xbf16>, vector<256x32xf32> -> vector<256x32xf32>
    %c0_5 = arith.constant 0 : index
    %c0_6 = arith.constant 0 : index
    %4 = vector.load %arg3[%c0_5, %c0_6] : memref<1x32xf32, #tpu.memory_space<vmem>>, vector<1x32xf32>
    %5 = vector.broadcast %4 : vector<1x32xf32> to vector<256x32xf32>
    %6 = arith.addf %3, %5 : vector<256x32xf32>
    %cst_7 = arith.constant 0.000000e+00 : f32
    %7 = vector.broadcast %cst_7 : f32 to vector<256x32xf32>
    %8 = arith.maximumf %6, %7 : vector<256x32xf32>
    %9 = vector.shape_cast %8 : vector<256x32xf32> to vector<4x64x32xf32>
    %cst_8 = arith.constant dense<0.000000e+00> : vector<4x32xf32>
    %10 = vector.multi_reduction <add>, %9, %cst_8 [1] : vector<4x64x32xf32> to vector<4x32xf32>
    %cst_9 = arith.constant 1.562500e-02 : f32
    %11 = vector.broadcast %cst_9 : f32 to vector<4x32xf32>
    %12 = arith.mulf %10, %11 : vector<4x32xf32>
    %cst_10 = arith.constant 0.000000e+00 : f32
    %13 = vector.broadcast %cst_10 : f32 to vector<2x64xf32>
    %14 = vector.extract_strided_slice %12 {offsets = [0, 0], sizes = [2, 32], strides = [1, 1]} : vector<4x32xf32> to vector<2x32xf32>
    %15 = arith.truncf %14 : vector<2x32xf32> to vector<2x32xbf16>
    %c0_11 = arith.constant 0 : index
    %c0_12 = arith.constant 0 : index
    %16 = vector.load %arg4[%c0_11, %c0_12] : memref<64x64xbf16, #tpu.memory_space<vmem>>, vector<32x64xbf16>
    %cst_13 = arith.constant dense<0.000000e+00> : vector<2x64xf32>
    %17 = tpu.matmul %15, %16, %cst_13 {dimension_numbers = #tpu.dot_dimension_numbers<[1], [0], [0], [1], [0, 0, 1, 1], [], []>} : vector<2x32xbf16>, vector<32x64xbf16>, vector<2x64xf32> -> vector<2x64xf32>
    %18 = arith.addf %13, %17 : vector<2x64xf32>
    %19 = vector.extract_strided_slice %12 {offsets = [2, 0], sizes = [2, 32], strides = [1, 1]} : vector<4x32xf32> to vector<2x32xf32>
    %20 = arith.truncf %19 : vector<2x32xf32> to vector<2x32xbf16>
    %c32 = arith.constant 32 : index
    %c0_14 = arith.constant 0 : index
    %21 = vector.load %arg4[%c32, %c0_14] : memref<64x64xbf16, #tpu.memory_space<vmem>>, vector<32x64xbf16>
    %cst_15 = arith.constant dense<0.000000e+00> : vector<2x64xf32>
    %22 = tpu.matmul %20, %21, %cst_15 {dimension_numbers = #tpu.dot_dimension_numbers<[1], [0], [0], [1], [0, 0, 1, 1], [], []>} : vector<2x32xbf16>, vector<32x64xbf16>, vector<2x64xf32> -> vector<2x64xf32>
    %23 = arith.addf %18, %22 : vector<2x64xf32>
    %c0_16 = arith.constant 0 : index
    %c0_17 = arith.constant 0 : index
    %24 = vector.load %arg5[%c0_16, %c0_17] : memref<1x64xf32, #tpu.memory_space<vmem>>, vector<1x64xf32>
    %25 = vector.broadcast %24 : vector<1x64xf32> to vector<2x64xf32>
    %26 = arith.addf %23, %25 : vector<2x64xf32>
    %cst_18 = arith.constant 0.000000e+00 : f32
    %27 = vector.broadcast %cst_18 : f32 to vector<2x64xf32>
    %28 = arith.maximumf %26, %27 : vector<2x64xf32>
    %29 = arith.truncf %28 : vector<2x64xf32> to vector<2x64xbf16>
    %c0_19 = arith.constant 0 : index
    %c0_20 = arith.constant 0 : index
    %30 = vector.load %arg6[%c0_19, %c0_20] : memref<64x10xbf16, #tpu.memory_space<vmem>>, vector<64x10xbf16>
    %cst_21 = arith.constant dense<0.000000e+00> : vector<2x10xf32>
    %31 = tpu.matmul %29, %30, %cst_21 {dimension_numbers = #tpu.dot_dimension_numbers<[1], [0], [0], [1], [0, 0, 1, 1], [], []>} : vector<2x64xbf16>, vector<64x10xbf16>, vector<2x10xf32> -> vector<2x10xf32>
    %c0_22 = arith.constant 0 : index
    %c0_23 = arith.constant 0 : index
    %32 = vector.load %arg7[%c0_22, %c0_23] : memref<1x10xf32, #tpu.memory_space<vmem>>, vector<1x10xf32>
    %33 = vector.broadcast %32 : vector<1x10xf32> to vector<2x10xf32>
    %34 = arith.addf %31, %33 : vector<2x10xf32>
    %c0_24 = arith.constant 0 : index
    %c0_25 = arith.constant 0 : index
    %35 = vector.load %arg8[%c0_24, %c0_25] : memref<2x10xf32, #tpu.memory_space<vmem>>, vector<2x10xf32>
    tpu.vector_store %arg8[%c0_24, %c0_25], %34 {strides = array<i32>} : memref<2x10xf32, #tpu.memory_space<vmem>>, vector<2x10xf32>,
    return
  }
  func.func @transform_0(%arg0: i32) -> (i32, i32, i32, i32) {
    %c0_i32 = arith.constant 0 : i32
    %c0_i32_0 = arith.constant 0 : i32
    %c0_i32_1 = arith.constant 0 : i32
    %c0_i32_2 = arith.constant 0 : i32
    return %c0_i32, %arg0, %c0_i32_0, %c0_i32_1 : i32, i32, i32, i32
  }
  func.func @transform_1(%arg0: i32) -> (i32, i32) {
    %c0_i32 = arith.constant 0 : i32
    %c0_i32_0 = arith.constant 0 : i32
    %c0_i32_1 = arith.constant 0 : i32
    return %c0_i32, %c0_i32_0 : i32, i32
  }
  func.func @transform_2(%arg0: i32) -> (i32, i32) {
    %c0_i32 = arith.constant 0 : i32
    %c0_i32_0 = arith.constant 0 : i32
    %c0_i32_1 = arith.constant 0 : i32
    return %c0_i32, %c0_i32_0 : i32, i32
  }
  func.func @transform_3(%arg0: i32) -> (i32, i32) {
    %c0_i32 = arith.constant 0 : i32
    %c0_i32_0 = arith.constant 0 : i32
    %c0_i32_1 = arith.constant 0 : i32
    return %c0_i32, %c0_i32_0 : i32, i32
  }
  func.func @transform_4(%arg0: i32) -> (i32, i32) {
    %c0_i32 = arith.constant 0 : i32
    %c0_i32_0 = arith.constant 0 : i32
    %c0_i32_1 = arith.constant 0 : i32
    return %c0_i32, %c0_i32_0 : i32, i32
  }
  func.func @transform_5(%arg0: i32) -> (i32, i32) {
    %c0_i32 = arith.constant 0 : i32
    %c0_i32_0 = arith.constant 0 : i32
    %c0_i32_1 = arith.constant 0 : i32
    return %c0_i32, %c0_i32_0 : i32, i32
  }
  func.func @transform_6(%arg0: i32) -> (i32, i32) {
    %c0_i32 = arith.constant 0 : i32
    %c0_i32_0 = arith.constant 0 : i32
    %c0_i32_1 = arith.constant 0 : i32
    return %c0_i32, %c0_i32_0 : i32, i32
  }
  func.func @transform_7(%arg0: i32) -> (i32, i32) {
    %c0_i32 = arith.constant 0 : i32
    %c0_i32_0 = arith.constant 0 : i32
    return %arg0, %c0_i32 : i32, i32
  }
}

</mosaic_0001>

<llo_original>
// kernel: continual_classifier_forward.1
$region0: #{continual_classifier_forward.1}
  #allocation0 [shape = 'u32[]', space=smem, size = 0x4, offset = 0x4, fixed_abs, tag = 'smem constant byte address 0x4 - core index']
  #allocation1 [shape = 'u32[144,128]{1,0:T(1,128)}', space=vmem, size = 0x12000, scoped, tag = 'internal scratch']
  %s0 = inlined_call_operand.vmem [shape: bf16[2,2,64,4], index: 0, kind: input, shape index: {}]
  %s1 = inlined_call_operand.vmem [shape: bf16[4,32], index: 1, kind: input, shape index: {}]
  %s2 = inlined_call_operand.vmem [shape: f32[1,32], index: 2, kind: input, shape index: {}]
  %s3 = inlined_call_operand.vmem [shape: bf16[64,64], index: 3, kind: input, shape index: {}]
  %s4 = inlined_call_operand.vmem [shape: f32[1,64], index: 4, kind: input, shape index: {}]
  %s5 = inlined_call_operand.vmem [shape: bf16[64,10], index: 5, kind: input, shape index: {}]
  %s6 = inlined_call_operand.vmem [shape: f32[1,10], index: 6, kind: input, shape index: {}]
  %s7 = inlined_call_operand.vmem [shape: f32[2,10], index: 7, kind: output, shape index: {}]
  %s8 = sld [smem:[#allocation0]]
  $region38: #{continual_classifier_forward.1} parent=0
    _
  %s10 = ssub.s32 1, %s8
  %s11 = scalar_select 0, %s10, %s8
  // Predicated region
  $region2: #{continual_classifier_forward.1} parent=0 // pred_check
    _
  $region3: #{continual_classifier_forward.1} parent=0 // pred_check_branch
    %13 = sbr.rel (0) target = $region5
  $region4: #{continual_classifier_forward.1} parent=0 // pred_region
    _
  $region5: #{continual_classifier_forward.1} parent=0 // pred_fallthru
    _
  // Predicated region
  $region6: #{continual_classifier_forward.1} parent=0 // pred_check
    _
  $region7: #{continual_classifier_forward.1} parent=0 // pred_check_branch
    %15 = sbr.rel (0) target = $region9
  $region8: #{continual_classifier_forward.1} parent=0 // pred_region
    _
  $region9: #{continual_classifier_forward.1} parent=0 // pred_fallthru
    _
  // Predicated region
  $region10: #{continual_classifier_forward.1} parent=0 // pred_check
    _
  $region11: #{continual_classifier_forward.1} parent=0 // pred_check_branch
    %17 = sbr.rel (0) target = $region13
  $region12: #{continual_classifier_forward.1} parent=0 // pred_region
    _
  $region13: #{continual_classifier_forward.1} parent=0 // pred_fallthru
    _
  // Predicated region
  $region14: #{continual_classifier_forward.1} parent=0 // pred_check
    _
  $region15: #{continual_classifier_forward.1} parent=0 // pred_check_branch
    %19 = sbr.rel (0) target = $region17
  $region16: #{continual_classifier_forward.1} parent=0 // pred_region
    _
  $region17: #{continual_classifier_forward.1} parent=0 // pred_fallthru
    _
  // Predicated region
  $region18: #{continual_classifier_forward.1} parent=0 // pred_check
    _
  $region19: #{continual_classifier_forward.1} parent=0 // pred_check_branch
    %21 = sbr.rel (0) target = $region21
  $region20: #{continual_classifier_forward.1} parent=0 // pred_region
    _
  $region21: #{continual_classifier_forward.1} parent=0 // pred_fallthru
    _
  // Predicated region
  $region22: #{continual_classifier_forward.1} parent=0 // pred_check
    _
  $region23: #{continual_classifier_forward.1} parent=0 // pred_check_branch
    %23 = sbr.rel (0) target = $region25
  $region24: #{continual_classifier_forward.1} parent=0 // pred_region
    _
  $region25: #{continual_classifier_forward.1} parent=0 // pred_fallthru
    _
  // Predicated region
  $region26: #{continual_classifier_forward.1} parent=0 // pred_check
    _
  $region27: #{continual_classifier_forward.1} parent=0 // pred_check_branch
    %25 = sbr.rel (0) target = $region29
  $region28: #{continual_classifier_forward.1} parent=0 // pred_region
    _
  $region29: #{continual_classifier_forward.1} parent=0 // pred_fallthru
    _
  %v27 = vld [vmem:[%s0] sm:$0xf]
  %v28 = vld [vmem:[%s0 + $0x4] sm:$0xf]
  %v29 = vld [vmem:[%s0 + $0x8] sm:$0xf]
  %v30 = vld [vmem:[%s0 + $0xc] sm:$0xf]
  %v31 = vld [vmem:[%s0 + $0x10] sm:$0xf]
  %v32 = vld [vmem:[%s0 + $0x14] sm:$0xf]
  %v33 = vld [vmem:[%s0 + $0x18] sm:$0xf]
  %v34 = vld [vmem:[%s0 + $0x1c] sm:$0xf]
  %v35 = vld [vmem:[%s0 + $0x20] sm:$0xf]
  %v36 = vld [vmem:[%s0 + $0x24] sm:$0xf]
  %v37 = vld [vmem:[%s0 + $0x28] sm:$0xf]
  %v38 = vld [vmem:[%s0 + $0x2c] sm:$0xf]
  %v39 = vld [vmem:[%s0 + $0x30] sm:$0xf]
  %v40 = vld [vmem:[%s0 + $0x34] sm:$0xf]
  %v41 = vld [vmem:[%s0 + $0x38] sm:$0xf]
  %v42 = vld [vmem:[%s0 + $0x3c] sm:$0xf]
  %v43 = vld [vmem:[%s0 + $0x40] sm:$0xf]
  %v44 = vld [vmem:[%s0 + $0x44] sm:$0xf]
  %v45 = vld [vmem:[%s0 + $0x48] sm:$0xf]
  %v46 = vld [vmem:[%s0 + $0x4c] sm:$0xf]
  %v47 = vld [vmem:[%s0 + $0x50] sm:$0xf]
  %v48 = vld [vmem:[%s0 + $0x54] sm:$0xf]
  %v49 = vld [vmem:[%s0 + $0x58] sm:$0xf]
  %v50 = vld [vmem:[%s0 + $0x5c] sm:$0xf]
  %v51 = vld [vmem:[%s0 + $0x60] sm:$0xf]
  %v52 = vld [vmem:[%s0 + $0x64] sm:$0xf]
  %v53 = vld [vmem:[%s0 + $0x68] sm:$0xf]
  %v54 = vld [vmem:[%s0 + $0x6c] sm:$0xf]
  %v55 = vld [vmem:[%s0 + $0x70] sm:$0xf]
  %v56 = vld [vmem:[%s0 + $0x74] sm:$0xf]
  %v57 = vld [vmem:[%s0 + $0x78] sm:$0xf]
  %v58 = vld [vmem:[%s0 + $0x7c] sm:$0xf]
  %v59 = vld [vmem:[%s1] sm:$0x3]
  %v60 = vld [vmem:[%s2] sm:$0x1]
  %v62 = vlaneseq
  %v63 = vshrl.u32 %v62, 7
  %v64 = vsub.s32 0, %v63
  %v65 = vrot.slane %v60, %v64
  %v99 = vunpack.c.l.b16 %v27
  %v100 = vunpack.c.l.b16 %v28
  %v101 = vunpack.c.l.b16 %v29
  %v102 = vunpack.c.l.b16 %v30
  %v103 = vunpack.c.l.b16 %v31
  %v104 = vunpack.c.l.b16 %v32
  %v105 = vunpack.c.l.b16 %v33
  %v106 = vunpack.c.l.b16 %v34
  %v107 = vunpack.c.l.b16 %v35
  %v108 = vunpack.c.l.b16 %v36
  %v109 = vunpack.c.l.b16 %v37
  %v110 = vunpack.c.l.b16 %v38
  %v111 = vunpack.c.l.b16 %v39
  %v112 = vunpack.c.l.b16 %v40
  %v113 = vunpack.c.l.b16 %v41
  %v114 = vunpack.c.l.b16 %v42
  %v115 = vunpack.c.l.b16 %v43
  %v116 = vunpack.c.l.b16 %v44
  %v117 = vunpack.c.l.b16 %v45
  %v118 = vunpack.c.l.b16 %v46
  %v119 = vunpack.c.l.b16 %v47
  %v120 = vunpack.c.l.b16 %v48
  %v121 = vunpack.c.l.b16 %v49
  %v122 = vunpack.c.l.b16 %v50
  %v123 = vunpack.c.l.b16 %v51
  %v124 = vunpack.c.l.b16 %v52
  %v125 = vunpack.c.l.b16 %v53
  %v126 = vunpack.c.l.b16 %v54
  %v127 = vunpack.c.l.b16 %v55
  %v128 = vunpack.c.l.b16 %v56
  %v129 = vunpack.c.l.b16 %v57
  %v130 = vunpack.c.l.b16 %v58
  %v131 = vpack.c.b16 %v100, %v99
  %v132 = vpack.c.b16 %v102, %v101
  %v133 = vpack.c.b16 %v104, %v103
  %v134 = vpack.c.b16 %v106, %v105
  %v135 = vpack.c.b16 %v108, %v107
  %v136 = vpack.c.b16 %v110, %v109
  %v137 = vpack.c.b16 %v112, %v111
  %v138 = vpack.c.b16 %v114, %v113
  %v139 = vpack.c.b16 %v116, %v115
  %v140 = vpack.c.b16 %v118, %v117
  %v141 = vpack.c.b16 %v120, %v119
  %v142 = vpack.c.b16 %v122, %v121
  %v143 = vpack.c.b16 %v124, %v123
  %v144 = vpack.c.b16 %v126, %v125
  %v145 = vpack.c.b16 %v128, %v127
  %v146 = vpack.c.b16 %v130, %v129
  %vm147 = vcmask 31744
  %v149 = vsel %vm147, %v131, 0
  %v152 = vsel %vm147, %v132, 0
  %v155 = vsel %vm147, %v133, 0
  %v158 = vsel %vm147, %v134, 0
  %v161 = vsel %vm147, %v135, 0
  %v164 = vsel %vm147, %v136, 0
  %v167 = vsel %vm147, %v137, 0
  %v170 = vsel %vm147, %v138, 0
  %v173 = vsel %vm147, %v139, 0
  %v176 = vsel %vm147, %v140, 0
  %v179 = vsel %vm147, %v141, 0
  %v182 = vsel %vm147, %v142, 0
  %v185 = vsel %vm147, %v143, 0
  %v188 = vsel %vm147, %v144, 0
  %v191 = vsel %vm147, %v145, 0
  %v194 = vsel %vm147, %v146, 0
  %vm196 = vcmask 1041408
  %v198 = vsel %vm196, %v59, 0
  %200 = vmatprep.subr.bf16.mxu0 0
  %201 = vmatpush1.bf16.msra.mxu0 %v198
  %202 = vmatprep.subr.bf16.mxu0 0
  %203 = vmatpush1.bf16.msra.mxu0 0
  %204 = vmatprep.subr.bf16.mxu0 0
  %205 = vmatpush1.bf16.msra.mxu0 0
  %206 = vmatprep.subr.bf16.mxu0 0
  %207 = vmatpush1.bf16.msra.mxu0 0
  %208 = vmatprep.subr.bf16.mxu0 0
  %209 = vmatpush1.bf16.msra.mxu0 0
  %210 = vmatprep.subr.bf16.mxu0 0
  %211 = vmatpush1.bf16.msra.mxu0 0
  %212 = vmatprep.subr.bf16.mxu0 0
  %213 = vmatpush1.bf16.msra.mxu0 0
  %214 = vmatprep.subr.bf16.mxu0 0
  %215 = vmatpush1.bf16.msra.mxu0 0
  %216 = vmatprep.subr.bf16.mxu0 0
  %217 = vmatpush1.bf16.msra.mxu0 0
  %218 = vmatprep.subr.bf16.mxu0 0
  %219 = vmatpush1.bf16.msra.mxu0 0
  %220 = vmatprep.subr.bf16.mxu0 0
  %221 = vmatpush1.bf16.msra.mxu0 0
  %222 = vmatprep.subr.bf16.mxu0 0
  %223 = vmatpush1.bf16.msra.mxu0 0
  %224 = vmatprep.subr.bf16.mxu0 0
  %225 = vmatpush1.bf16.msra.mxu0 0
  %226 = vmatprep.subr.bf16.mxu0 0
  %227 = vmatpush1.bf16.msra.mxu0 0
  %228 = vmatprep.subr.bf16.mxu0 0
  %229 = vmatpush1.bf16.msra.mxu0 0
  %230 = vmatprep.subr.bf16.mxu0 0
  %231 = vmatpush1.bf16.msra.mxu0 0
  %232 = vmatprep.mubr.bf16.mxu0 0
  %233 = vmatmul.mubr.bf16.gmra.mrb[0].mxu0 %v149
  %v234 = vpop.f32.mrb[0].mxu0
  %v235 = vadd.f32 %v65, %v234
  %v236 = vpop.f32.mrb[0].mxu0
  %v237 = vpop.f32.mrb[0].mxu0
  %v238 = vadd.f32 %v65, %v237
  %v239 = vpop.f32.mrb[0].mxu0
  %240 = vmatprep.mubr.bf16.mxu0 0
  %241 = vmatmul.mubr.bf16.gmra.mrb[0].mxu0 %v152
  %v242 = vpop.f32.mrb[0].mxu0
  %v243 = vadd.f32 %v65, %v242
  %v244 = vpop.f32.mrb[0].mxu0
  %v245 = vpop.f32.mrb[0].mxu0
  %v246 = vadd.f32 %v65, %v245
  %v247 = vpop.f32.mrb[0].mxu0
  %248 = vmatprep.mubr.bf16.mxu0 0
  %249 = vmatmul.mubr.bf16.gmra.mrb[0].mxu0 %v155
  %v250 = vpop.f32.mrb[0].mxu0
  %v251 = vadd.f32 %v65, %v250
  %v252 = vpop.f32.mrb[0].mxu0
  %v253 = vpop.f32.mrb[0].mxu0
  %v254 = vadd.f32 %v65, %v253
  %v255 = vpop.f32.mrb[0].mxu0
  %256 = vmatprep.mubr.bf16.mxu0 0
  %257 = vmatmul.mubr.bf16.gmra.mrb[0].mxu0 %v158
  %v258 = vpop.f32.mrb[0].mxu0
  %v259 = vadd.f32 %v65, %v258
  %v260 = vpop.f32.mrb[0].mxu0
  %v261 = vpop.f32.mrb[0].mxu0
  %v262 = vadd.f32 %v65, %v261
  %v263 = vpop.f32.mrb[0].mxu0
  %264 = vmatprep.mubr.bf16.mxu0 0
  %265 = vmatmul.mubr.bf16.gmra.mrb[0].mxu0 %v161
  %v266 = vpop.f32.mrb[0].mxu0
  %v267 = vadd.f32 %v65, %v266
  %v268 = vpop.f32.mrb[0].mxu0
  %v269 = vpop.f32.mrb[0].mxu0
  %v270 = vadd.f32 %v65, %v269
  %v271 = vpop.f32.mrb[0].mxu0
  %272 = vmatprep.mubr.bf16.mxu0 0
  %273 = vmatmul.mubr.bf16.gmra.mrb[0].mxu0 %v164
  %v274 = vpop.f32.mrb[0].mxu0
  %v275 = vadd.f32 %v65, %v274
  %v276 = vpop.f32.mrb[0].mxu0
  %v277 = vpop.f32.mrb[0].mxu0
  %v278 = vadd.f32 %v65, %v277
  %v279 = vpop.f32.mrb[0].mxu0
  %280 = vmatprep.mubr.bf16.mxu0 0
  %281 = vmatmul.mubr.bf16.gmra.mrb[0].mxu0 %v167
  %v282 = vpop.f32.mrb[0].mxu0
  %v283 = vadd.f32 %v65, %v282
  %v284 = vpop.f32.mrb[0].mxu0
  %v285 = vpop.f32.mrb[0].mxu0
  %v286 = vadd.f32 %v65, %v285
  %v287 = vpop.f32.mrb[0].mxu0
  %288 = vmatprep.mubr.bf16.mxu0 0
  %289 = vmatmul.mubr.bf16.gmra.mrb[0].mxu0 %v170
  %v290 = vpop.f32.mrb[0].mxu0
  %v291 = vadd.f32 %v65, %v290
  %v292 = vpop.f32.mrb[0].mxu0
  %v293 = vpop.f32.mrb[0].mxu0
  %v294 = vadd.f32 %v65, %v293
  %v295 = vpop.f32.mrb[0].mxu0
  %296 = vmatprep.mubr.bf16.mxu0 0
  %297 = vmatmul.mubr.bf16.gmra.mrb[0].mxu0 %v173
  %v298 = vpop.f32.mrb[0].mxu0
  %v299 = vadd.f32 %v65, %v298
  %v300 = vpop.f32.mrb[0].mxu0
  %v301 = vpop.f32.mrb[0].mxu0
  %v302 = vadd.f32 %v65, %v301
  %v303 = vpop.f32.mrb[0].mxu0
  %304 = vmatprep.mubr.bf16.mxu0 0
  %305 = vmatmul.mubr.bf16.gmra.mrb[0].mxu0 %v176
  %v306 = vpop.f32.mrb[0].mxu0
  %v307 = vadd.f32 %v65, %v306
  %v308 = vpop.f32.mrb[0].mxu0
  %v309 = vpop.f32.mrb[0].mxu0
  %v310 = vadd.f32 %v65, %v309
  %v311 = vpop.f32.mrb[0].mxu0
  %312 = vmatprep.mubr.bf16.mxu0 0
  %313 = vmatmul.mubr.bf16.gmra.mrb[0].mxu0 %v179
  %v314 = vpop.f32.mrb[0].mxu0
  %v315 = vadd.f32 %v65, %v314
  %v316 = vpop.f32.mrb[0].mxu0
  %v317 = vpop.f32.mrb[0].mxu0
  %v318 = vadd.f32 %v65, %v317
  %v319 = vpop.f32.mrb[0].mxu0
  %320 = vmatprep.mubr.bf16.mxu0 0
  %321 = vmatmul.mubr.bf16.gmra.mrb[0].mxu0 %v182
  %v322 = vpop.f32.mrb[0].mxu0
  %v323 = vadd.f32 %v65, %v322
  %v324 = vpop.f32.mrb[0].mxu0
  %v325 = vpop.f32.mrb[0].mxu0
  %v326 = vadd.f32 %v65, %v325
  %v327 = vpop.f32.mrb[0].mxu0
  %328 = vmatprep.mubr.bf16.mxu0 0
  %329 = vmatmul.mubr.bf16.gmra.mrb[0].mxu0 %v185
  %v330 = vpop.f32.mrb[0].mxu0
  %v331 = vadd.f32 %v65, %v330
  %v332 = vpop.f32.mrb[0].mxu0
  %v333 = vpop.f32.mrb[0].mxu0
  %v334 = vadd.f32 %v65, %v333
  %v335 = vpop.f32.mrb[0].mxu0
  %336 = vmatprep.mubr.bf16.mxu0 0
  %337 = vmatmul.mubr.bf16.gmra.mrb[0].mxu0 %v188
  %v338 = vpop.f32.mrb[0].mxu0
  %v339 = vadd.f32 %v65, %v338
  %v340 = vpop.f32.mrb[0].mxu0
  %v341 = vpop.f32.mrb[0].mxu0
  %v342 = vadd.f32 %v65, %v341
  %v343 = vpop.f32.mrb[0].mxu0
  %344 = vmatprep.mubr.bf16.mxu0 0
  %345 = vmatmul.mubr.bf16.gmra.mrb[0].mxu0 %v191
  %v346 = vpop.f32.mrb[0].mxu0
  %v347 = vadd.f32 %v65, %v346
  %v348 = vpop.f32.mrb[0].mxu0
  %v349 = vpop.f32.mrb[0].mxu0
  %v350 = vadd.f32 %v65, %v349
  %v351 = vpop.f32.mrb[0].mxu0
  %352 = vmatprep.mubr.bf16.mxu0 0
  %353 = vmatmul.mubr.bf16.gmra.mrb[0].mxu0 %v194
  %v354 = vpop.f32.mrb[0].mxu0
  %v355 = vadd.f32 %v65, %v354
  %v356 = vpop.f32.mrb[0].mxu0
  %v357 = vpop.f32.mrb[0].mxu0
  %v358 = vadd.f32 %v65, %v357
  %v359 = vpop.f32.mrb[0].mxu0
  %360 = vdwg.mxu0
  %v361 = vmax.f32 %v235, 0.0
  %v362 = vmax.f32 %v238, 0.0
  %v363 = vmax.f32 %v243, 0.0
  %v364 = vmax.f32 %v246, 0.0
  %v365 = vmax.f32 %v251, 0.0
  %v366 = vmax.f32 %v254, 0.0
  %v367 = vmax.f32 %v259, 0.0
  %v368 = vmax.f32 %v262, 0.0
  %v369 = vmax.f32 %v267, 0.0
  %v370 = vmax.f32 %v270, 0.0
  %v371 = vmax.f32 %v275, 0.0
  %v372 = vmax.f32 %v278, 0.0
  %v373 = vmax.f32 %v283, 0.0
  %v374 = vmax.f32 %v286, 0.0
  %v375 = vmax.f32 %v291, 0.0
  %v376 = vmax.f32 %v294, 0.0
  %v377 = vmax.f32 %v299, 0.0
  %v378 = vmax.f32 %v302, 0.0
  %v379 = vmax.f32 %v307, 0.0
  %v380 = vmax.f32 %v310, 0.0
  %v381 = vmax.f32 %v315, 0.0
  %v382 = vmax.f32 %v318, 0.0
  %v383 = vmax.f32 %v323, 0.0
  %v384 = vmax.f32 %v326, 0.0
  %v385 = vmax.f32 %v331, 0.0
  %v386 = vmax.f32 %v334, 0.0
  %v387 = vmax.f32 %v339, 0.0
  %v388 = vmax.f32 %v342, 0.0
  %v389 = vmax.f32 %v347, 0.0
  %v390 = vmax.f32 %v350, 0.0
  %v391 = vmax.f32 %v355, 0.0
  %v392 = vmax.f32 %v358, 0.0
  %vm393 = vcmask 261120
  %v394 = vsel %vm393, %v361, 0.0
  %v395 = vsel %vm393, %v362, 0.0
  %v396 = vadd.f32 %v394, %v395
  %v397 = vsel %vm393, %v363, 0.0
  %v398 = vadd.f32 %v396, %v397
  %v399 = vsel %vm393, %v364, 0.0
  %v400 = vadd.f32 %v398, %v399
  %v401 = vsel %vm393, %v365, 0.0
  %v402 = vadd.f32 %v400, %v401
  %v403 = vsel %vm393, %v366, 0.0
  %v404 = vadd.f32 %v402, %v403
  %v405 = vsel %vm393, %v367, 0.0
  %v406 = vadd.f32 %v404, %v405
  %v407 = vsel %vm393, %v368, 0.0
  %v408 = vadd.f32 %v406, %v407
  %v409 = vrot.slane %v408, 4
  %v410 = vadd.f32 %v408, %v409
  %v411 = vrot.slane %v410, 2
  %v412 = vadd.f32 %v410, %v411
  %v413 = vrot.slane %v412, 1
  %v414 = vadd.f32 %v412, %v413
  %v415 = vsel %vm393, %v369, 0.0
  %v416 = vsel %vm393, %v370, 0.0
  %v417 = vadd.f32 %v415, %v416
  %v418 = vsel %vm393, %v371, 0.0
  %v419 = vadd.f32 %v417, %v418
  %v420 = vsel %vm393, %v372, 0.0
  %v421 = vadd.f32 %v419, %v420
  %v422 = vsel %vm393, %v373, 0.0
  %v423 = vadd.f32 %v421, %v422
  %v424 = vsel %vm393, %v374, 0.0
  %v425 = vadd.f32 %v423, %v424
  %v426 = vsel %vm393, %v375, 0.0
  %v427 = vadd.f32 %v425, %v426
  %v428 = vsel %vm393, %v376, 0.0
  %v429 = vadd.f32 %v427, %v428
  %v430 = vrot.slane %v429, 4
  %v431 = vadd.f32 %v429, %v430
  %v432 = vrot.slane %v431, 2
  %v433 = vadd.f32 %v431, %v432
  %v434 = vrot.slane %v433, 1
  %v435 = vadd.f32 %v433, %v434
  %v436 = vsel %vm393, %v377, 0.0
  %v437 = vsel %vm393, %v378, 0.0
  %v438 = vadd.f32 %v436, %v437
  %v439 = vsel %vm393, %v379, 0.0
  %v440 = vadd.f32 %v438, %v439
  %v441 = vsel %vm393, %v380, 0.0
  %v442 = vadd.f32 %v440, %v441
  %v443 = vsel %vm393, %v381, 0.0
  %v444 = vadd.f32 %v442, %v443
  %v445 = vsel %vm393, %v382, 0.0
  %v446 = vadd.f32 %v444, %v445
  %v447 = vsel %vm393, %v383, 0.0
  %v448 = vadd.f32 %v446, %v447
  %v449 = vsel %vm393, %v384, 0.0
  %v450 = vadd.f32 %v448, %v449
  %v451 = vrot.slane %v450, 4
  %v452 = vadd.f32 %v450, %v451
  %v453 = vrot.slane %v452, 2
  %v454 = vadd.f32 %v452, %v453
  %v455 = vrot.slane %v454, 1
  %v456 = vadd.f32 %v454, %v455
  %v457 = vsel %vm393, %v385, 0.0
  %v458 = vsel %vm393, %v386, 0.0
  %v459 = vadd.f32 %v457, %v458
  %v460 = vsel %vm393, %v387, 0.0
  %v461 = vadd.f32 %v459, %v460
  %v462 = vsel %vm393, %v388, 0.0
  %v463 = vadd.f32 %v461, %v462
  %v464 = vsel %vm393, %v389, 0.0
  %v465 = vadd.f32 %v463, %v464
  %v466 = vsel %vm393, %v390, 0.0
  %v467 = vadd.f32 %v465, %v466
  %v468 = vsel %vm393, %v391, 0.0
  %v469 = vadd.f32 %v467, %v468
  %v470 = vsel %vm393, %v392, 0.0
  %v471 = vadd.f32 %v469, %v470
  %v472 = vrot.slane %v471, 4
  %v473 = vadd.f32 %v471, %v472
  %v474 = vrot.slane %v473, 2
  %v475 = vadd.f32 %v473, %v474
  %v476 = vrot.slane %v475, 1
  %v477 = vadd.f32 %v475, %v476
  %v478 = vmul.f32 %v414, 0.015625
  %v479 = vmul.f32 %v435, 0.015625
  %v480 = vmul.f32 %v456, 0.015625
  %v481 = vmul.f32 %v477, 0.015625
  %v482 = vpack.c.bf16 %v478, %v478
  %v483 = vpack.c.bf16 %v479, %v479
  %v484 = vld [vmem:[%s3] sm:$0xf]
  %v485 = vld [vmem:[%s3 + $0x4] sm:$0xf]
  %v486 = vld [vmem:[%s3 + $0x8] sm:$0xf]
  %v487 = vld [vmem:[%s3 + $0xc] sm:$0xf]
  %v488 = vpack.c.bf16 %v480, %v480
  %v489 = vpack.c.bf16 %v481, %v481
  %v490 = vld [vmem:[%s3 + $0x10] sm:$0xf]
  %v491 = vld [vmem:[%s3 + $0x14] sm:$0xf]
  %v492 = vld [vmem:[%s3 + $0x18] sm:$0xf]
  %v493 = vld [vmem:[%s3 + $0x1c] sm:$0xf]
  %v496 = vunpack.c.l.b16 %v488
  %v497 = vunpack.c.l.b16 %v489
  %vm498 = vcmask 1041409
  %v499 = vsel %vm498, %v497, %v496
  %v500 = vpack.c.b16 %v499, %v499
  %v505 = vunpack.c.l.b16 %v490
  %v506 = vunpack.c.l.b16 %v491
  %v507 = vunpack.c.l.b16 %v492
  %v508 = vunpack.c.l.b16 %v493
  %v509 = vpack.c.b16 %v506, %v505
  %v510 = vpack.c.b16 %v508, %v507
  %v514 = vsel %vm393, %v500, 0
  %516 = vmatprep.subr.bf16.mxu0 0
  %517 = vmatpush1.bf16.msra.mxu0 %v509
  %518 = vmatprep.subr.bf16.mxu0 0
  %519 = vmatpush1.bf16.msra.mxu0 %v510
  %520 = vmatprep.subr.bf16.mxu0 0
  %521 = vmatpush1.bf16.msra.mxu0 0
  %522 = vmatprep.subr.bf16.mxu0 0
  %523 = vmatpush1.bf16.msra.mxu0 0
  %524 = vmatprep.subr.bf16.mxu0 0
  %525 = vmatpush1.bf16.msra.mxu0 0
  %526 = vmatprep.subr.bf16.mxu0 0
  %527 = vmatpush1.bf16.msra.mxu0 0
  %528 = vmatprep.subr.bf16.mxu0 0
  %529 = vmatpush1.bf16.msra.mxu0 0
  %530 = vmatprep.subr.bf16.mxu0 0
  %531 = vmatpush1.bf16.msra.mxu0 0
  %532 = vmatprep.subr.bf16.mxu0 0
  %533 = vmatpush1.bf16.msra.mxu0 0
  %534 = vmatprep.subr.bf16.mxu0 0
  %535 = vmatpush1.bf16.msra.mxu0 0
  %536 = vmatprep.subr.bf16.mxu0 0
  %537 = vmatpush1.bf16.msra.mxu0 0
  %538 = vmatprep.subr.bf16.mxu0 0
  %539 = vmatpush1.bf16.msra.mxu0 0
  %540 = vmatprep.subr.bf16.mxu0 0
  %541 = vmatpush1.bf16.msra.mxu0 0
  %542 = vmatprep.subr.bf16.mxu0 0
  %543 = vmatpush1.bf16.msra.mxu0 0
  %544 = vmatprep.subr.bf16.mxu0 0
  %545 = vmatpush1.bf16.msra.mxu0 0
  %546 = vmatprep.subr.bf16.mxu0 0
  %547 = vmatpush1.bf16.msra.mxu0 0
  %548 = vmatprep.mubr.bf16.mxu0 0
  %549 = vmatmul.mubr.bf16.gmra.mrb[0].mxu0 %v514
  %v550 = vpop.f32.mrb[0].mxu0
  %v551 = vadd.f32 0.0, %v550
  %v552 = vpop.f32.mrb[0].mxu0
  %v553 = vpop.f32.mrb[0].mxu0
  %v554 = vpop.f32.mrb[0].mxu0
  %555 = vdwg.mxu0
  %v558 = vunpack.c.l.b16 %v482
  %v559 = vunpack.c.l.b16 %v483
  %v560 = vsel %vm498, %v559, %v558
  %v561 = vpack.c.b16 %v560, %v560
  %v566 = vunpack.c.l.b16 %v484
  %v567 = vunpack.c.l.b16 %v485
  %v568 = vunpack.c.l.b16 %v486
  %v569 = vunpack.c.l.b16 %v487
  %v570 = vpack.c.b16 %v567, %v566
  %v571 = vpack.c.b16 %v569, %v568
  %v575 = vsel %vm393, %v561, 0
  %577 = vmatprep.subr.bf16.mxu0 0
  %578 = vmatpush1.bf16.msra.mxu0 %v570
  %579 = vmatprep.subr.bf16.mxu0 0
  %580 = vmatpush1.bf16.msra.mxu0 %v571
  %581 = vmatprep.subr.bf16.mxu0 0
  %582 = vmatpush1.bf16.msra.mxu0 0
  %583 = vmatprep.subr.bf16.mxu0 0
  %584 = vmatpush1.bf16.msra.mxu0 0
  %585 = vmatprep.subr.bf16.mxu0 0
  %586 = vmatpush1.bf16.msra.mxu0 0
  %587 = vmatprep.subr.bf16.mxu0 0
  %588 = vmatpush1.bf16.msra.mxu0 0
  %589 = vmatprep.subr.bf16.mxu0 0
  %590 = vmatpush1.bf16.msra.mxu0 0
  %591 = vmatprep.subr.bf16.mxu0 0
  %592 = vmatpush1.bf16.msra.mxu0 0
  %593 = vmatprep.subr.bf16.mxu0 0
  %594 = vmatpush1.bf16.msra.mxu0 0
  %595 = vmatprep.subr.bf16.mxu0 0
  %596 = vmatpush1.bf16.msra.mxu0 0
  %597 = vmatprep.subr.bf16.mxu0 0
  %598 = vmatpush1.bf16.msra.mxu0 0
  %599 = vmatprep.subr.bf16.mxu0 0
  %600 = vmatpush1.bf16.msra.mxu0 0
  %601 = vmatprep.subr.bf16.mxu0 0
  %602 = vmatpush1.bf16.msra.mxu0 0
  %603 = vmatprep.subr.bf16.mxu0 0
  %604 = vmatpush1.bf16.msra.mxu0 0
  %605 = vmatprep.subr.bf16.mxu0 0
  %606 = vmatpush1.bf16.msra.mxu0 0
  %607 = vmatprep.subr.bf16.mxu0 0
  %608 = vmatpush1.bf16.msra.mxu0 0
  %609 = vmatprep.mubr.bf16.mxu0 0
  %610 = vmatmul.mubr.bf16.gmra.mrb[0].mxu0 %v575
  %v611 = vpop.f32.mrb[0].mxu0
  %v612 = vadd.f32 %v551, %v611
  %v613 = vpop.f32.mrb[0].mxu0
  %v614 = vpop.f32.mrb[0].mxu0
  %v615 = vpop.f32.mrb[0].mxu0
  %616 = vdwg.mxu0
  %v617 = vld [vmem:[%s4] sm:$0x1]
  %v619 = vlaneseq
  %v620 = vshrl.u32 %v619, 7
  %v621 = vsub.s32 0, %v620
  %v622 = vrot.slane %v617, %v621
  %v624 = vadd.f32 %v612, %v622
  %v625 = vmax.f32 %v624, 0.0
  %v626 = vpack.c.bf16 %v625, %v625
  %v627 = vld [vmem:[%s5] sm:$0xf]
  %v628 = vld [vmem:[%s5 + $0x4] sm:$0xf]
  %v629 = vld [vmem:[%s5 + $0x8] sm:$0xf]
  %v630 = vld [vmem:[%s5 + $0xc] sm:$0xf]
  %v631 = vld [vmem:[%s5 + $0x10] sm:$0xf]
  %v632 = vld [vmem:[%s5 + $0x14] sm:$0xf]
  %v633 = vld [vmem:[%s5 + $0x18] sm:$0xf]
  %v634 = vld [vmem:[%s5 + $0x1c] sm:$0xf]
  %v635 = vld [vmem:[%s6] sm:$0x1]
  %v637 = vlaneseq
  %v638 = vshrl.u32 %v637, 7
  %v639 = vsub.s32 0, %v638
  %v640 = vrot.slane %v635, %v639
  %v650 = vunpack.c.l.b16 %v627
  %v651 = vunpack.c.l.b16 %v628
  %v652 = vunpack.c.l.b16 %v629
  %v653 = vunpack.c.l.b16 %v630
  %v654 = vunpack.c.l.b16 %v631
  %v655 = vunpack.c.l.b16 %v632
  %v656 = vunpack.c.l.b16 %v633
  %v657 = vunpack.c.l.b16 %v634
  %v658 = vpack.c.b16 %v651, %v650
  %v659 = vpack.c.b16 %v653, %v652
  %v660 = vpack.c.b16 %v655, %v654
  %v661 = vpack.c.b16 %v657, %v656
  %vm666 = vcmask 523264
  %v668 = vsel %vm666, %v626, 0
  %670 = vmatprep.subr.bf16.mxu0 0
  %671 = vmatpush1.bf16.msra.mxu0 %v658
  %672 = vmatprep.subr.bf16.mxu0 0
  %673 = vmatpush1.bf16.msra.mxu0 %v659
  %674 = vmatprep.subr.bf16.mxu0 0
  %675 = vmatpush1.bf16.msra.mxu0 %v660
  %676 = vmatprep.subr.bf16.mxu0 0
  %677 = vmatpush1.bf16.msra.mxu0 %v661
  %678 = vmatprep.subr.bf16.mxu0 0
  %679 = vmatpush1.bf16.msra.mxu0 0
  %680 = vmatprep.subr.bf16.mxu0 0
  %681 = vmatpush1.bf16.msra.mxu0 0
  %682 = vmatprep.subr.bf16.mxu0 0
  %683 = vmatpush1.bf16.msra.mxu0 0
  %684 = vmatprep.subr.bf16.mxu0 0
  %685 = vmatpush1.bf16.msra.mxu0 0
  %686 = vmatprep.subr.bf16.mxu0 0
  %687 = vmatpush1.bf16.msra.mxu0 0
  %688 = vmatprep.subr.bf16.mxu0 0
  %689 = vmatpush1.bf16.msra.mxu0 0
  %690 = vmatprep.subr.bf16.mxu0 0
  %691 = vmatpush1.bf16.msra.mxu0 0
  %692 = vmatprep.subr.bf16.mxu0 0
  %693 = vmatpush1.bf16.msra.mxu0 0
  %694 = vmatprep.subr.bf16.mxu0 0
  %695 = vmatpush1.bf16.msra.mxu0 0
  %696 = vmatprep.subr.bf16.mxu0 0
  %697 = vmatpush1.bf16.msra.mxu0 0
  %698 = vmatprep.subr.bf16.mxu0 0
  %699 = vmatpush1.bf16.msra.mxu0 0
  %700 = vmatprep.subr.bf16.mxu0 0
  %701 = vmatpush1.bf16.msra.mxu0 0
  %702 = vmatprep.mubr.bf16.mxu0 0
  %703 = vmatmul.mubr.bf16.gmra.mrb[0].mxu0 %v668
  %v704 = vpop.f32.mrb[0].mxu0
  %v705 = vadd.f32 %v640, %v704
  %v706 = vpop.f32.mrb[0].mxu0
  %v707 = vpop.f32.mrb[0].mxu0
  %v708 = vpop.f32.mrb[0].mxu0
  %709 = vdwg.mxu0
  %vm710 = vcmask 74752
  %711 = vst.msk [vmem:[%s7] sm:$0x3] %vm710, %v705
  // Predicated region
  $region30: #{continual_classifier_forward.1} parent=0 // pred_check
    _
  $region31: #{continual_classifier_forward.1} parent=0 // pred_check_branch
    %713 = sbr.rel (0) target = $region33
  $region32: #{continual_classifier_forward.1} parent=0 // pred_region
    _
  $region33: #{continual_classifier_forward.1} parent=0 // pred_fallthru
    _
  // Predicated region
  $region34: #{continual_classifier_forward.1} parent=0 // pred_check
    _
  $region35: #{continual_classifier_forward.1} parent=0 // pred_check_branch
    %715 = sbr.rel (0) target = $region37
  $region36: #{continual_classifier_forward.1} parent=0 // pred_region
    _
  $region37: #{continual_classifier_forward.1} parent=0 // pred_fallthru
    _

</llo_original>
